<compile_context>
chip_gen: v6e
topology: v6e:2x2x1
jax: 0.10.0
libtpu: 0.0.40
codegen_flags: <defaults>
</compile_context>

<pallas_src>
import functools

import jax
import jax.numpy as jnp
from jax.experimental import pallas as pl
from jax.experimental.pallas import tpu as pltpu


def _slstm_kernel(T, p_interval, F, H, x_ref, w_ref, out_ref):
    N = out_ref.shape[0]

    # Packed weights, sliced by 8-aligned row ranges (single input DMA).
    wx = w_ref[0:F, :]                    # (F, 4H)
    wh = w_ref[F:F + H, :]                # (H, 4H)
    b = w_ref[F + H:F + H + 1, :]         # (1, 4H)

    # Hoisted input projection: one matmul covers every timestep's x-term.
    # x_ref is (T*N, F); result is (T*N, 4H), sliced per step below.
    z_x = jnp.dot(x_ref[...], wx, preferred_element_type=jnp.float32) + b

    h = [jnp.zeros((N, H), jnp.float32) for _ in range(p_interval)]
    c = jnp.zeros((N, H), jnp.float32)

    n_rounds = (T + p_interval - 1) // p_interval
    for r in range(n_rounds):
        t0 = r * p_interval
        n_steps = min(p_interval, T - t0)

        if r == 0:
            # All h slots are still zero -> skip the recurrent matmul.
            hz = None
        else:
            # All slots used this round were finalized last round: batch them
            # into one (n_steps*N, H) @ (H, 4H) MXU push per round.
            h_stack = jnp.concatenate([h[j] for j in range(n_steps)], axis=0)
            hz = jnp.dot(h_stack, wh, preferred_element_type=jnp.float32)

        for j in range(n_steps):
            t = t0 + j                     # idx = t % p_interval == j
            z = z_x[t * N:(t + 1) * N, :]  # (N, 4H), static sublane slice
            if hz is not None:
                z = z + hz[j * N:(j + 1) * N, :]

            # Fused f/i/o softmax: shared row-max + single exp on (N, 3H).
            zfio = z[:, 0:3 * H]
            m = jnp.max(zfio, axis=-1, keepdims=True)
            e = jnp.exp(zfio - m)
            e_f = e[:, 0:H]
            e_i = e[:, H:2 * H]
            e_o = e[:, 2 * H:3 * H]
            f = e_f * pl.reciprocal(jnp.sum(e_f, axis=-1, keepdims=True),
                                    approx=True)
            i = e_i * pl.reciprocal(jnp.sum(e_i, axis=-1, keepdims=True),
                                    approx=True)
            o = e_o * pl.reciprocal(jnp.sum(e_o, axis=-1, keepdims=True),
                                    approx=True)
            g = jnp.tanh(z[:, 3 * H:4 * H])

            if t == 0:
                # PyTorch: c is still the 3-D zero state -> f * 0 drops out.
                c = jnp.tanh(i * g)
            else:
                # PyTorch quirk: c is 2-D here, c[j] is a single row that
                # broadcasts over the batch.
                c_prev = c[j:j + 1, :]                    # (1, H)
                c = jnp.tanh(f * c_prev + i * g)          # (N, H)
            h[j] = o * c

    # Single output write (final h[(T-1) % p_interval] only).
    out_ref[...] = h[(T - 1) % p_interval].astype(out_ref.dtype)


def slstm_forward(x, params, p_interval):
    """x: (T, N, F) time-major, params: per-gate dict as from init_params."""
    T, N, F = x.shape
    H = params["whf"].shape[0]

    # Fuse the four gates into one wide weight pair + bias, then pack all of
    # Wx/Wh/b into a single (F+H+1, 4H) array (one weight DMA).
    # Gate order: f, i, o, g  ->  z[:, k*H:(k+1)*H].
    wx = jnp.concatenate([params["wx" + n] for n in ("f", "i", "o", "g")], axis=-1)
    wh = jnp.concatenate([params["wh" + n] for n in ("f", "i", "o", "g")], axis=-1)
    b = jnp.concatenate([params["b" + n] for n in ("f", "i", "o", "g")], axis=-1)
    w_packed = jnp.concatenate([wx, wh, b], axis=0)      # (F+H+1, 4H)

    # Collapse time into rows outside the kernel (free XLA reshape) so the
    # kernel can do the whole input projection in one lane-dense matmul.
    x2 = x.reshape(T * N, F)

    kernel = functools.partial(_slstm_kernel, T, p_interval, F, H)

    return pl.pallas_call(
        kernel,
        out_shape=jax.ShapeDtypeStruct((N, H), jnp.float32),
        grid_spec=pltpu.PrefetchScalarGridSpec(
            num_scalar_prefetch=0,
            grid=(1,),
            in_specs=[
                pl.BlockSpec((T * N, F), lambda i: (0, 0)),
                pl.BlockSpec((F + H + 1, 4 * H), lambda i: (0, 0)),
            ],
            out_specs=pl.BlockSpec((N, H), lambda i: (0, 0)),
        ),
        compiler_params=pltpu.CompilerParams(
            dimension_semantics=("arbitrary",)),
    )(x2, w_packed)


def slstm_reference(x, params, p_interval):
    """Pure-JAX replica of the PyTorch forward (including the 2-D `c` quirk)."""
    T, N, F = x.shape
    H = params["whf"].shape[0]
    h = jnp.zeros((p_interval, N, H), jnp.float32)
    c = jnp.zeros((p_interval, N, H), jnp.float32)  # becomes 2-D after t=0

    def lin(x_, hp, name):
        return x_ @ params["wx" + name] + hp @ params["wh" + name] + params["b" + name]

    for t in range(T):
        idx = t % p_interval
        x_ = x[t]
        hp = h[idx]
        f = jax.nn.softmax(lin(x_, hp, "f"), axis=1)
        i = jax.nn.softmax(lin(x_, hp, "i"), axis=1)
        o = jax.nn.softmax(lin(x_, hp, "o"), axis=1)
        g = jnp.tanh(lin(x_, hp, "g"))
        c_prev = c[idx]                      # (N,H) at t==0, (H,) row afterwards
        c = jnp.tanh(f * c_prev + i * g)     # rebinds c to 2-D, as in PyTorch
        h = h.at[idx].set(o * c)
    return h[(T - 1) % p_interval]


def init_params(key, feature_dim, hidden_dim):
    params = {}
    for name in ("f", "i", "o", "g"):
        key, k1, k2, k3 = jax.random.split(key, 4)
        params["wx" + name] = 0.1 * jax.random.normal(
            k1, (feature_dim, hidden_dim), jnp.float32)
        params["wh" + name] = 0.1 * jax.random.normal(
            k2, (hidden_dim, hidden_dim), jnp.float32)
        params["b" + name] = 0.1 * jax.random.normal(
            k3, (1, hidden_dim), jnp.float32)
    return params


if __name__ == "__main__":
    T, N, F, H = 8, 16, 8, 32        # seq len, batch (nodes), feature_dim, hidden_dim
    p_interval = 4                   # must be <= N (same constraint as the PyTorch code)

    key = jax.random.PRNGKey(0)
    key, kx = jax.random.split(key)
    x = jax.random.normal(kx, (T, N, F), jnp.float32)
    params = init_params(key, F, H)

    out = slstm_forward(x, params, p_interval)
    out = jax.block_until_ready(out)

    ref = jax.block_until_ready(slstm_reference(x, params, p_interval))
    max_err = float(jnp.max(jnp.abs(out - ref)))
    assert out.shape == (N, H)
    assert max_err < 1e-3, f"mismatch vs reference: {max_err}"

    print("KERNEL_OK")
</pallas_src>

<mosaic_0001>
module attributes {stable_mosaic.version = 11 : i64} {
  func.func @_slstm_kernel(%arg0: i32, %arg1: memref<128x8xf32, #tpu.memory_space<vmem>>, %arg2: memref<41x128xf32, #tpu.memory_space<vmem>>, %arg3: memref<16x32xf32, #tpu.memory_space<vmem>>) attributes {dimension_semantics = [#tpu.dimension_semantics<arbitrary>], iteration_bounds = array<i64: 1>, scalar_prefetch = 0 : i64, scratch_operands = 0 : i64, tpu.core_type = #tpu.core_type<tc>, window_params = [{pipeline_mode = #tpu.pipeline_mode<synchronous>, transform_indices = @transform_0, window_bounds = array<i64: 128, 8>}, {pipeline_mode = #tpu.pipeline_mode<synchronous>, transform_indices = @transform_1, window_bounds = array<i64: 41, 128>}, {pipeline_mode = #tpu.pipeline_mode<synchronous>, transform_indices = @transform_2, window_bounds = array<i64: 16, 32>}]} {
    %c0 = arith.constant 0 : index
    %c0_0 = arith.constant 0 : index
    %0 = vector.load %arg2[%c0, %c0_0] : memref<41x128xf32, #tpu.memory_space<vmem>>, vector<8x128xf32>
    %c8 = arith.constant 8 : index
    %c0_1 = arith.constant 0 : index
    %1 = vector.load %arg2[%c8, %c0_1] : memref<41x128xf32, #tpu.memory_space<vmem>>, vector<32x128xf32>
    %c40 = arith.constant 40 : index
    %c0_2 = arith.constant 0 : index
    %2 = vector.load %arg2[%c40, %c0_2] : memref<41x128xf32, #tpu.memory_space<vmem>>, vector<1x128xf32>
    %c0_3 = arith.constant 0 : index
    %c0_4 = arith.constant 0 : index
    %3 = vector.load %arg1[%c0_3, %c0_4] : memref<128x8xf32, #tpu.memory_space<vmem>>, vector<128x8xf32>
    %cst = arith.constant dense<0.000000e+00> : vector<128x128xf32>
    %4 = tpu.matmul %3, %0, %cst {dimension_numbers = #tpu.dot_dimension_numbers<[1], [0], [0], [1], [0, 0, 1, 1], [], []>} : vector<128x8xf32>, vector<8x128xf32>, vector<128x128xf32> -> vector<128x128xf32>
    %5 = vector.broadcast %2 : vector<1x128xf32> to vector<128x128xf32>
    %6 = arith.addf %4, %5 : vector<128x128xf32>
    %7 = vector.extract_strided_slice %6 {offsets = [0, 0], sizes = [16, 128], strides = [1, 1]} : vector<128x128xf32> to vector<16x128xf32>
    %8 = vector.extract_strided_slice %7 {offsets = [0, 0], sizes = [16, 96], strides = [1, 1]} : vector<16x128xf32> to vector<16x96xf32>
    %cst_5 = arith.constant dense<0xFF800000> : vector<16xf32>
    %9 = vector.multi_reduction <maximumf>, %8, %cst_5 [1] : vector<16x96xf32> to vector<16xf32>
    %10 = vector.shape_cast %9 : vector<16xf32> to vector<16x1xf32>
    %11 = vector.broadcast %10 : vector<16x1xf32> to vector<16x96xf32>
    %12 = arith.subf %8, %11 : vector<16x96xf32>
    %13 = math.exp %12 : vector<16x96xf32>
    %14 = vector.extract_strided_slice %13 {offsets = [0, 32], sizes = [16, 32], strides = [1, 1]} : vector<16x96xf32> to vector<16x32xf32>
    %15 = vector.extract_strided_slice %13 {offsets = [0, 64], sizes = [16, 32], strides = [1, 1]} : vector<16x96xf32> to vector<16x32xf32>
    %cst_6 = arith.constant dense<0.000000e+00> : vector<16xf32>
    %16 = vector.multi_reduction <add>, %14, %cst_6 [1] : vector<16x32xf32> to vector<16xf32>
    %17 = vector.shape_cast %16 : vector<16xf32> to vector<16x1xf32>
    %18 = tpu.reciprocal %17 {approx = true} : vector<16x1xf32> -> vector<16x1xf32>
    %19 = vector.broadcast %18 : vector<16x1xf32> to vector<16x32xf32>
    %20 = arith.mulf %14, %19 : vector<16x32xf32>
    %cst_7 = arith.constant dense<0.000000e+00> : vector<16xf32>
    %21 = vector.multi_reduction <add>, %15, %cst_7 [1] : vector<16x32xf32> to vector<16xf32>
    %22 = vector.shape_cast %21 : vector<16xf32> to vector<16x1xf32>
    %23 = tpu.reciprocal %22 {approx = true} : vector<16x1xf32> -> vector<16x1xf32>
    %24 = vector.broadcast %23 : vector<16x1xf32> to vector<16x32xf32>
    %25 = arith.mulf %15, %24 : vector<16x32xf32>
    %26 = vector.extract_strided_slice %7 {offsets = [0, 96], sizes = [16, 32], strides = [1, 1]} : vector<16x128xf32> to vector<16x32xf32>
    %27 = math.tanh %26 : vector<16x32xf32>
    %28 = arith.mulf %20, %27 : vector<16x32xf32>
    %29 = math.tanh %28 : vector<16x32xf32>
    %30 = arith.mulf %25, %29 : vector<16x32xf32>
    %31 = vector.extract_strided_slice %6 {offsets = [16, 0], sizes = [16, 128], strides = [1, 1]} : vector<128x128xf32> to vector<16x128xf32>
    %32 = vector.extract_strided_slice %31 {offsets = [0, 0], sizes = [16, 96], strides = [1, 1]} : vector<16x128xf32> to vector<16x96xf32>
    %cst_8 = arith.constant dense<0xFF800000> : vector<16xf32>
    %33 = vector.multi_reduction <maximumf>, %32, %cst_8 [1] : vector<16x96xf32> to vector<16xf32>
    %34 = vector.shape_cast %33 : vector<16xf32> to vector<16x1xf32>
    %35 = vector.broadcast %34 : vector<16x1xf32> to vector<16x96xf32>
    %36 = arith.subf %32, %35 : vector<16x96xf32>
    %37 = math.exp %36 : vector<16x96xf32>
    %38 = vector.extract_strided_slice %37 {offsets = [0, 0], sizes = [16, 32], strides = [1, 1]} : vector<16x96xf32> to vector<16x32xf32>
    %39 = vector.extract_strided_slice %37 {offsets = [0, 32], sizes = [16, 32], strides = [1, 1]} : vector<16x96xf32> to vector<16x32xf32>
    %40 = vector.extract_strided_slice %37 {offsets = [0, 64], sizes = [16, 32], strides = [1, 1]} : vector<16x96xf32> to vector<16x32xf32>
    %cst_9 = arith.constant dense<0.000000e+00> : vector<16xf32>
    %41 = vector.multi_reduction <add>, %38, %cst_9 [1] : vector<16x32xf32> to vector<16xf32>
    %42 = vector.shape_cast %41 : vector<16xf32> to vector<16x1xf32>
    %43 = tpu.reciprocal %42 {approx = true} : vector<16x1xf32> -> vector<16x1xf32>
    %44 = vector.broadcast %43 : vector<16x1xf32> to vector<16x32xf32>
    %45 = arith.mulf %38, %44 : vector<16x32xf32>
    %cst_10 = arith.constant dense<0.000000e+00> : vector<16xf32>
    %46 = vector.multi_reduction <add>, %39, %cst_10 [1] : vector<16x32xf32> to vector<16xf32>
    %47 = vector.shape_cast %46 : vector<16xf32> to vector<16x1xf32>
    %48 = tpu.reciprocal %47 {approx = true} : vector<16x1xf32> -> vector<16x1xf32>
    %49 = vector.broadcast %48 : vector<16x1xf32> to vector<16x32xf32>
    %50 = arith.mulf %39, %49 : vector<16x32xf32>
    %cst_11 = arith.constant dense<0.000000e+00> : vector<16xf32>
    %51 = vector.multi_reduction <add>, %40, %cst_11 [1] : vector<16x32xf32> to vector<16xf32>
    %52 = vector.shape_cast %51 : vector<16xf32> to vector<16x1xf32>
    %53 = tpu.reciprocal %52 {approx = true} : vector<16x1xf32> -> vector<16x1xf32>
    %54 = vector.broadcast %53 : vector<16x1xf32> to vector<16x32xf32>
    %55 = arith.mulf %40, %54 : vector<16x32xf32>
    %56 = vector.extract_strided_slice %31 {offsets = [0, 96], sizes = [16, 32], strides = [1, 1]} : vector<16x128xf32> to vector<16x32xf32>
    %57 = math.tanh %56 : vector<16x32xf32>
    %58 = vector.extract_strided_slice %29 {offsets = [1, 0], sizes = [1, 32], strides = [1, 1]} : vector<16x32xf32> to vector<1x32xf32>
    %59 = vector.broadcast %58 : vector<1x32xf32> to vector<16x32xf32>
    %60 = arith.mulf %45, %59 : vector<16x32xf32>
    %61 = arith.mulf %50, %57 : vector<16x32xf32>
    %62 = arith.addf %60, %61 : vector<16x32xf32>
    %63 = math.tanh %62 : vector<16x32xf32>
    %64 = arith.mulf %55, %63 : vector<16x32xf32>
    %65 = vector.extract_strided_slice %6 {offsets = [32, 0], sizes = [16, 128], strides = [1, 1]} : vector<128x128xf32> to vector<16x128xf32>
    %66 = vector.extract_strided_slice %65 {offsets = [0, 0], sizes = [16, 96], strides = [1, 1]} : vector<16x128xf32> to vector<16x96xf32>
    %cst_12 = arith.constant dense<0xFF800000> : vector<16xf32>
    %67 = vector.multi_reduction <maximumf>, %66, %cst_12 [1] : vector<16x96xf32> to vector<16xf32>
    %68 = vector.shape_cast %67 : vector<16xf32> to vector<16x1xf32>
    %69 = vector.broadcast %68 : vector<16x1xf32> to vector<16x96xf32>
    %70 = arith.subf %66, %69 : vector<16x96xf32>
    %71 = math.exp %70 : vector<16x96xf32>
    %72 = vector.extract_strided_slice %71 {offsets = [0, 0], sizes = [16, 32], strides = [1, 1]} : vector<16x96xf32> to vector<16x32xf32>
    %73 = vector.extract_strided_slice %71 {offsets = [0, 32], sizes = [16, 32], strides = [1, 1]} : vector<16x96xf32> to vector<16x32xf32>
    %74 = vector.extract_strided_slice %71 {offsets = [0, 64], sizes = [16, 32], strides = [1, 1]} : vector<16x96xf32> to vector<16x32xf32>
    %cst_13 = arith.constant dense<0.000000e+00> : vector<16xf32>
    %75 = vector.multi_reduction <add>, %72, %cst_13 [1] : vector<16x32xf32> to vector<16xf32>
    %76 = vector.shape_cast %75 : vector<16xf32> to vector<16x1xf32>
    %77 = tpu.reciprocal %76 {approx = true} : vector<16x1xf32> -> vector<16x1xf32>
    %78 = vector.broadcast %77 : vector<16x1xf32> to vector<16x32xf32>
    %79 = arith.mulf %72, %78 : vector<16x32xf32>
    %cst_14 = arith.constant dense<0.000000e+00> : vector<16xf32>
    %80 = vector.multi_reduction <add>, %73, %cst_14 [1] : vector<16x32xf32> to vector<16xf32>
    %81 = vector.shape_cast %80 : vector<16xf32> to vector<16x1xf32>
    %82 = tpu.reciprocal %81 {approx = true} : vector<16x1xf32> -> vector<16x1xf32>
    %83 = vector.broadcast %82 : vector<16x1xf32> to vector<16x32xf32>
    %84 = arith.mulf %73, %83 : vector<16x32xf32>
    %cst_15 = arith.constant dense<0.000000e+00> : vector<16xf32>
    %85 = vector.multi_reduction <add>, %74, %cst_15 [1] : vector<16x32xf32> to vector<16xf32>
    %86 = vector.shape_cast %85 : vector<16xf32> to vector<16x1xf32>
    %87 = tpu.reciprocal %86 {approx = true} : vector<16x1xf32> -> vector<16x1xf32>
    %88 = vector.broadcast %87 : vector<16x1xf32> to vector<16x32xf32>
    %89 = arith.mulf %74, %88 : vector<16x32xf32>
    %90 = vector.extract_strided_slice %65 {offsets = [0, 96], sizes = [16, 32], strides = [1, 1]} : vector<16x128xf32> to vector<16x32xf32>
    %91 = math.tanh %90 : vector<16x32xf32>
    %92 = vector.extract_strided_slice %63 {offsets = [2, 0], sizes = [1, 32], strides = [1, 1]} : vector<16x32xf32> to vector<1x32xf32>
    %93 = vector.broadcast %92 : vector<1x32xf32> to vector<16x32xf32>
    %94 = arith.mulf %79, %93 : vector<16x32xf32>
    %95 = arith.mulf %84, %91 : vector<16x32xf32>
    %96 = arith.addf %94, %95 : vector<16x32xf32>
    %97 = math.tanh %96 : vector<16x32xf32>
    %98 = arith.mulf %89, %97 : vector<16x32xf32>
    %99 = vector.extract_strided_slice %6 {offsets = [48, 0], sizes = [16, 128], strides = [1, 1]} : vector<128x128xf32> to vector<16x128xf32>
    %100 = vector.extract_strided_slice %99 {offsets = [0, 0], sizes = [16, 96], strides = [1, 1]} : vector<16x128xf32> to vector<16x96xf32>
    %cst_16 = arith.constant dense<0xFF800000> : vector<16xf32>
    %101 = vector.multi_reduction <maximumf>, %100, %cst_16 [1] : vector<16x96xf32> to vector<16xf32>
    %102 = vector.shape_cast %101 : vector<16xf32> to vector<16x1xf32>
    %103 = vector.broadcast %102 : vector<16x1xf32> to vector<16x96xf32>
    %104 = arith.subf %100, %103 : vector<16x96xf32>
    %105 = math.exp %104 : vector<16x96xf32>
    %106 = vector.extract_strided_slice %105 {offsets = [0, 0], sizes = [16, 32], strides = [1, 1]} : vector<16x96xf32> to vector<16x32xf32>
    %107 = vector.extract_strided_slice %105 {offsets = [0, 32], sizes = [16, 32], strides = [1, 1]} : vector<16x96xf32> to vector<16x32xf32>
    %108 = vector.extract_strided_slice %105 {offsets = [0, 64], sizes = [16, 32], strides = [1, 1]} : vector<16x96xf32> to vector<16x32xf32>
    %cst_17 = arith.constant dense<0.000000e+00> : vector<16xf32>
    %109 = vector.multi_reduction <add>, %106, %cst_17 [1] : vector<16x32xf32> to vector<16xf32>
    %110 = vector.shape_cast %109 : vector<16xf32> to vector<16x1xf32>
    %111 = tpu.reciprocal %110 {approx = true} : vector<16x1xf32> -> vector<16x1xf32>
    %112 = vector.broadcast %111 : vector<16x1xf32> to vector<16x32xf32>
    %113 = arith.mulf %106, %112 : vector<16x32xf32>
    %cst_18 = arith.constant dense<0.000000e+00> : vector<16xf32>
    %114 = vector.multi_reduction <add>, %107, %cst_18 [1] : vector<16x32xf32> to vector<16xf32>
    %115 = vector.shape_cast %114 : vector<16xf32> to vector<16x1xf32>
    %116 = tpu.reciprocal %115 {approx = true} : vector<16x1xf32> -> vector<16x1xf32>
    %117 = vector.broadcast %116 : vector<16x1xf32> to vector<16x32xf32>
    %118 = arith.mulf %107, %117 : vector<16x32xf32>
    %cst_19 = arith.constant dense<0.000000e+00> : vector<16xf32>
    %119 = vector.multi_reduction <add>, %108, %cst_19 [1] : vector<16x32xf32> to vector<16xf32>
    %120 = vector.shape_cast %119 : vector<16xf32> to vector<16x1xf32>
    %121 = tpu.reciprocal %120 {approx = true} : vector<16x1xf32> -> vector<16x1xf32>
    %122 = vector.broadcast %121 : vector<16x1xf32> to vector<16x32xf32>
    %123 = arith.mulf %108, %122 : vector<16x32xf32>
    %124 = vector.extract_strided_slice %99 {offsets = [0, 96], sizes = [16, 32], strides = [1, 1]} : vector<16x128xf32> to vector<16x32xf32>
    %125 = math.tanh %124 : vector<16x32xf32>
    %126 = vector.extract_strided_slice %97 {offsets = [3, 0], sizes = [1, 32], strides = [1, 1]} : vector<16x32xf32> to vector<1x32xf32>
    %127 = vector.broadcast %126 : vector<1x32xf32> to vector<16x32xf32>
    %128 = arith.mulf %113, %127 : vector<16x32xf32>
    %129 = arith.mulf %118, %125 : vector<16x32xf32>
    %130 = arith.addf %128, %129 : vector<16x32xf32>
    %131 = math.tanh %130 : vector<16x32xf32>
    %132 = arith.mulf %123, %131 : vector<16x32xf32>
    %133 = tpu.concatenate %30, %64, %98, %132 in 0 : vector<16x32xf32>, vector<16x32xf32>, vector<16x32xf32>, vector<16x32xf32> -> vector<64x32xf32>
    %cst_20 = arith.constant dense<0.000000e+00> : vector<64x128xf32>
    %134 = tpu.matmul %133, %1, %cst_20 {dimension_numbers = #tpu.dot_dimension_numbers<[1], [0], [0], [1], [0, 0, 1, 1], [], []>} : vector<64x32xf32>, vector<32x128xf32>, vector<64x128xf32> -> vector<64x128xf32>
    %135 = vector.extract_strided_slice %6 {offsets = [64, 0], sizes = [16, 128], strides = [1, 1]} : vector<128x128xf32> to vector<16x128xf32>
    %136 = vector.extract_strided_slice %134 {offsets = [0, 0], sizes = [16, 128], strides = [1, 1]} : vector<64x128xf32> to vector<16x128xf32>
    %137 = arith.addf %135, %136 : vector<16x128xf32>
    %138 = vector.extract_strided_slice %137 {offsets = [0, 0], sizes = [16, 96], strides = [1, 1]} : vector<16x128xf32> to vector<16x96xf32>
    %cst_21 = arith.constant dense<0xFF800000> : vector<16xf32>
    %139 = vector.multi_reduction <maximumf>, %138, %cst_21 [1] : vector<16x96xf32> to vector<16xf32>
    %140 = vector.shape_cast %139 : vector<16xf32> to vector<16x1xf32>
    %141 = vector.broadcast %140 : vector<16x1xf32> to vector<16x96xf32>
    %142 = arith.subf %138, %141 : vector<16x96xf32>
    %143 = math.exp %142 : vector<16x96xf32>
    %144 = vector.extract_strided_slice %143 {offsets = [0, 0], sizes = [16, 32], strides = [1, 1]} : vector<16x96xf32> to vector<16x32xf32>
    %145 = vector.extract_strided_slice %143 {offsets = [0, 32], sizes = [16, 32], strides = [1, 1]} : vector<16x96xf32> to vector<16x32xf32>
    %cst_22 = arith.constant dense<0.000000e+00> : vector<16xf32>
    %146 = vector.multi_reduction <add>, %144, %cst_22 [1] : vector<16x32xf32> to vector<16xf32>
    %147 = vector.shape_cast %146 : vector<16xf32> to vector<16x1xf32>
    %148 = tpu.reciprocal %147 {approx = true} : vector<16x1xf32> -> vector<16x1xf32>
    %149 = vector.broadcast %148 : vector<16x1xf32> to vector<16x32xf32>
    %150 = arith.mulf %144, %149 : vector<16x32xf32>
    %cst_23 = arith.constant dense<0.000000e+00> : vector<16xf32>
    %151 = vector.multi_reduction <add>, %145, %cst_23 [1] : vector<16x32xf32> to vector<16xf32>
    %152 = vector.shape_cast %151 : vector<16xf32> to vector<16x1xf32>
    %153 = tpu.reciprocal %152 {approx = true} : vector<16x1xf32> -> vector<16x1xf32>
    %154 = vector.broadcast %153 : vector<16x1xf32> to vector<16x32xf32>
    %155 = arith.mulf %145, %154 : vector<16x32xf32>
    %156 = vector.extract_strided_slice %137 {offsets = [0, 96], sizes = [16, 32], strides = [1, 1]} : vector<16x128xf32> to vector<16x32xf32>
    %157 = math.tanh %156 : vector<16x32xf32>
    %158 = vector.extract_strided_slice %131 {offsets = [0, 0], sizes = [1, 32], strides = [1, 1]} : vector<16x32xf32> to vector<1x32xf32>
    %159 = vector.broadcast %158 : vector<1x32xf32> to vector<16x32xf32>
    %160 = arith.mulf %150, %159 : vector<16x32xf32>
    %161 = arith.mulf %155, %157 : vector<16x32xf32>
    %162 = arith.addf %160, %161 : vector<16x32xf32>
    %163 = math.tanh %162 : vector<16x32xf32>
    %164 = vector.extract_strided_slice %6 {offsets = [80, 0], sizes = [16, 128], strides = [1, 1]} : vector<128x128xf32> to vector<16x128xf32>
    %165 = vector.extract_strided_slice %134 {offsets = [16, 0], sizes = [16, 128], strides = [1, 1]} : vector<64x128xf32> to vector<16x128xf32>
    %166 = arith.addf %164, %165 : vector<16x128xf32>
    %167 = vector.extract_strided_slice %166 {offsets = [0, 0], sizes = [16, 96], strides = [1, 1]} : vector<16x128xf32> to vector<16x96xf32>
    %cst_24 = arith.constant dense<0xFF800000> : vector<16xf32>
    %168 = vector.multi_reduction <maximumf>, %167, %cst_24 [1] : vector<16x96xf32> to vector<16xf32>
    %169 = vector.shape_cast %168 : vector<16xf32> to vector<16x1xf32>
    %170 = vector.broadcast %169 : vector<16x1xf32> to vector<16x96xf32>
    %171 = arith.subf %167, %170 : vector<16x96xf32>
    %172 = math.exp %171 : vector<16x96xf32>
    %173 = vector.extract_strided_slice %172 {offsets = [0, 0], sizes = [16, 32], strides = [1, 1]} : vector<16x96xf32> to vector<16x32xf32>
    %174 = vector.extract_strided_slice %172 {offsets = [0, 32], sizes = [16, 32], strides = [1, 1]} : vector<16x96xf32> to vector<16x32xf32>
    %cst_25 = arith.constant dense<0.000000e+00> : vector<16xf32>
    %175 = vector.multi_reduction <add>, %173, %cst_25 [1] : vector<16x32xf32> to vector<16xf32>
    %176 = vector.shape_cast %175 : vector<16xf32> to vector<16x1xf32>
    %177 = tpu.reciprocal %176 {approx = true} : vector<16x1xf32> -> vector<16x1xf32>
    %178 = vector.broadcast %177 : vector<16x1xf32> to vector<16x32xf32>
    %179 = arith.mulf %173, %178 : vector<16x32xf32>
    %cst_26 = arith.constant dense<0.000000e+00> : vector<16xf32>
    %180 = vector.multi_reduction <add>, %174, %cst_26 [1] : vector<16x32xf32> to vector<16xf32>
    %181 = vector.shape_cast %180 : vector<16xf32> to vector<16x1xf32>
    %182 = tpu.reciprocal %181 {approx = true} : vector<16x1xf32> -> vector<16x1xf32>
    %183 = vector.broadcast %182 : vector<16x1xf32> to vector<16x32xf32>
    %184 = arith.mulf %174, %183 : vector<16x32xf32>
    %185 = vector.extract_strided_slice %166 {offsets = [0, 96], sizes = [16, 32], strides = [1, 1]} : vector<16x128xf32> to vector<16x32xf32>
    %186 = math.tanh %185 : vector<16x32xf32>
    %187 = vector.extract_strided_slice %163 {offsets = [1, 0], sizes = [1, 32], strides = [1, 1]} : vector<16x32xf32> to vector<1x32xf32>
    %188 = vector.broadcast %187 : vector<1x32xf32> to vector<16x32xf32>
    %189 = arith.mulf %179, %188 : vector<16x32xf32>
    %190 = arith.mulf %184, %186 : vector<16x32xf32>
    %191 = arith.addf %189, %190 : vector<16x32xf32>
    %192 = math.tanh %191 : vector<16x32xf32>
    %193 = vector.extract_strided_slice %6 {offsets = [96, 0], sizes = [16, 128], strides = [1, 1]} : vector<128x128xf32> to vector<16x128xf32>
    %194 = vector.extract_strided_slice %134 {offsets = [32, 0], sizes = [16, 128], strides = [1, 1]} : vector<64x128xf32> to vector<16x128xf32>
    %195 = arith.addf %193, %194 : vector<16x128xf32>
    %196 = vector.extract_strided_slice %195 {offsets = [0, 0], sizes = [16, 96], strides = [1, 1]} : vector<16x128xf32> to vector<16x96xf32>
    %cst_27 = arith.constant dense<0xFF800000> : vector<16xf32>
    %197 = vector.multi_reduction <maximumf>, %196, %cst_27 [1] : vector<16x96xf32> to vector<16xf32>
    %198 = vector.shape_cast %197 : vector<16xf32> to vector<16x1xf32>
    %199 = vector.broadcast %198 : vector<16x1xf32> to vector<16x96xf32>
    %200 = arith.subf %196, %199 : vector<16x96xf32>
    %201 = math.exp %200 : vector<16x96xf32>
    %202 = vector.extract_strided_slice %201 {offsets = [0, 0], sizes = [16, 32], strides = [1, 1]} : vector<16x96xf32> to vector<16x32xf32>
    %203 = vector.extract_strided_slice %201 {offsets = [0, 32], sizes = [16, 32], strides = [1, 1]} : vector<16x96xf32> to vector<16x32xf32>
    %cst_28 = arith.constant dense<0.000000e+00> : vector<16xf32>
    %204 = vector.multi_reduction <add>, %202, %cst_28 [1] : vector<16x32xf32> to vector<16xf32>
    %205 = vector.shape_cast %204 : vector<16xf32> to vector<16x1xf32>
    %206 = tpu.reciprocal %205 {approx = true} : vector<16x1xf32> -> vector<16x1xf32>
    %207 = vector.broadcast %206 : vector<16x1xf32> to vector<16x32xf32>
    %208 = arith.mulf %202, %207 : vector<16x32xf32>
    %cst_29 = arith.constant dense<0.000000e+00> : vector<16xf32>
    %209 = vector.multi_reduction <add>, %203, %cst_29 [1] : vector<16x32xf32> to vector<16xf32>
    %210 = vector.shape_cast %209 : vector<16xf32> to vector<16x1xf32>
    %211 = tpu.reciprocal %210 {approx = true} : vector<16x1xf32> -> vector<16x1xf32>
    %212 = vector.broadcast %211 : vector<16x1xf32> to vector<16x32xf32>
    %213 = arith.mulf %203, %212 : vector<16x32xf32>
    %214 = vector.extract_strided_slice %195 {offsets = [0, 96], sizes = [16, 32], strides = [1, 1]} : vector<16x128xf32> to vector<16x32xf32>
    %215 = math.tanh %214 : vector<16x32xf32>
    %216 = vector.extract_strided_slice %192 {offsets = [2, 0], sizes = [1, 32], strides = [1, 1]} : vector<16x32xf32> to vector<1x32xf32>
    %217 = vector.broadcast %216 : vector<1x32xf32> to vector<16x32xf32>
    %218 = arith.mulf %208, %217 : vector<16x32xf32>
    %219 = arith.mulf %213, %215 : vector<16x32xf32>
    %220 = arith.addf %218, %219 : vector<16x32xf32>
    %221 = math.tanh %220 : vector<16x32xf32>
    %222 = vector.extract_strided_slice %6 {offsets = [112, 0], sizes = [16, 128], strides = [1, 1]} : vector<128x128xf32> to vector<16x128xf32>
    %223 = vector.extract_strided_slice %134 {offsets = [48, 0], sizes = [16, 128], strides = [1, 1]} : vector<64x128xf32> to vector<16x128xf32>
    %224 = arith.addf %222, %223 : vector<16x128xf32>
    %225 = vector.extract_strided_slice %224 {offsets = [0, 0], sizes = [16, 96], strides = [1, 1]} : vector<16x128xf32> to vector<16x96xf32>
    %cst_30 = arith.constant dense<0xFF800000> : vector<16xf32>
    %226 = vector.multi_reduction <maximumf>, %225, %cst_30 [1] : vector<16x96xf32> to vector<16xf32>
    %227 = vector.shape_cast %226 : vector<16xf32> to vector<16x1xf32>
    %228 = vector.broadcast %227 : vector<16x1xf32> to vector<16x96xf32>
    %229 = arith.subf %225, %228 : vector<16x96xf32>
    %230 = math.exp %229 : vector<16x96xf32>
    %231 = vector.extract_strided_slice %230 {offsets = [0, 0], sizes = [16, 32], strides = [1, 1]} : vector<16x96xf32> to vector<16x32xf32>
    %232 = vector.extract_strided_slice %230 {offsets = [0, 32], sizes = [16, 32], strides = [1, 1]} : vector<16x96xf32> to vector<16x32xf32>
    %233 = vector.extract_strided_slice %230 {offsets = [0, 64], sizes = [16, 32], strides = [1, 1]} : vector<16x96xf32> to vector<16x32xf32>
    %cst_31 = arith.constant dense<0.000000e+00> : vector<16xf32>
    %234 = vector.multi_reduction <add>, %231, %cst_31 [1] : vector<16x32xf32> to vector<16xf32>
    %235 = vector.shape_cast %234 : vector<16xf32> to vector<16x1xf32>
    %236 = tpu.reciprocal %235 {approx = true} : vector<16x1xf32> -> vector<16x1xf32>
    %237 = vector.broadcast %236 : vector<16x1xf32> to vector<16x32xf32>
    %238 = arith.mulf %231, %237 : vector<16x32xf32>
    %cst_32 = arith.constant dense<0.000000e+00> : vector<16xf32>
    %239 = vector.multi_reduction <add>, %232, %cst_32 [1] : vector<16x32xf32> to vector<16xf32>
    %240 = vector.shape_cast %239 : vector<16xf32> to vector<16x1xf32>
    %241 = tpu.reciprocal %240 {approx = true} : vector<16x1xf32> -> vector<16x1xf32>
    %242 = vector.broadcast %241 : vector<16x1xf32> to vector<16x32xf32>
    %243 = arith.mulf %232, %242 : vector<16x32xf32>
    %cst_33 = arith.constant dense<0.000000e+00> : vector<16xf32>
    %244 = vector.multi_reduction <add>, %233, %cst_33 [1] : vector<16x32xf32> to vector<16xf32>
    %245 = vector.shape_cast %244 : vector<16xf32> to vector<16x1xf32>
    %246 = tpu.reciprocal %245 {approx = true} : vector<16x1xf32> -> vector<16x1xf32>
    %247 = vector.broadcast %246 : vector<16x1xf32> to vector<16x32xf32>
    %248 = arith.mulf %233, %247 : vector<16x32xf32>
    %249 = vector.extract_strided_slice %224 {offsets = [0, 96], sizes = [16, 32], strides = [1, 1]} : vector<16x128xf32> to vector<16x32xf32>
    %250 = math.tanh %249 : vector<16x32xf32>
    %251 = vector.extract_strided_slice %221 {offsets = [3, 0], sizes = [1, 32], strides = [1, 1]} : vector<16x32xf32> to vector<1x32xf32>
    %252 = vector.broadcast %251 : vector<1x32xf32> to vector<16x32xf32>
    %253 = arith.mulf %238, %252 : vector<16x32xf32>
    %254 = arith.mulf %243, %250 : vector<16x32xf32>
    %255 = arith.addf %253, %254 : vector<16x32xf32>
    %256 = math.tanh %255 : vector<16x32xf32>
    %257 = arith.mulf %248, %256 : vector<16x32xf32>
    %c0_34 = arith.constant 0 : index
    %c0_35 = arith.constant 0 : index
    %258 = vector.load %arg3[%c0_34, %c0_35] : memref<16x32xf32, #tpu.memory_space<vmem>>, vector<16x32xf32>
    tpu.vector_store %arg3[%c0_34, %c0_35], %257 {strides = array<i32>} : memref<16x32xf32, #tpu.memory_space<vmem>>, vector<16x32xf32>,
    return
  }
  func.func @transform_0(%arg0: i32) -> (i32, i32) {
    %c0_i32 = arith.constant 0 : i32
    %c0_i32_0 = arith.constant 0 : i32
    %c0_i32_1 = arith.constant 0 : i32
    return %c0_i32, %c0_i32_0 : i32, i32
  }
  func.func @transform_1(%arg0: i32) -> (i32, i32) {
    %c0_i32 = arith.constant 0 : i32
    %c0_i32_0 = arith.constant 0 : i32
    %c0_i32_1 = arith.constant 0 : i32
    return %c0_i32, %c0_i32_0 : i32, i32
  }
  func.func @transform_2(%arg0: i32) -> (i32, i32) {
    %c0_i32 = arith.constant 0 : i32
    %c0_i32_0 = arith.constant 0 : i32
    %c0_i32_1 = arith.constant 0 : i32
    return %c0_i32, %c0_i32_0 : i32, i32
  }
}

</mosaic_0001>

<llo_original>
// kernel: tpu_custom_call.1
$region0: #{tpu_custom_call.1}
  #allocation0 [shape = 'u32[]', space=smem, size = 0x4, offset = 0x4, fixed_abs, tag = 'smem constant byte address 0x4 - core index']
  #allocation1 [shape = 'u32[144,128]{1,0:T(1,128)}', space=vmem, size = 0x12000, scoped, tag = 'internal scratch']
  %s0 = inlined_call_operand.vmem [shape: f32[128,8], index: 0, kind: input, shape index: {}]
  %s1 = inlined_call_operand.vmem [shape: f32[41,128], index: 1, kind: input, shape index: {}]
  %s2 = inlined_call_operand.hbm [shape: f32[16,32], index: 2, kind: output, shape index: {}]
  %s3 = sld [smem:[#allocation0]]
  $region18: #{tpu_custom_call.1} parent=0
    _
  %s5 = ssub.s32 1, %s3
  %s6 = scalar_select 0, %s5, %s3
  $region1: #{tpu_custom_call.1} parent=0
    #allocation2 [shape = 'u8[8192]{0}', space=vmem, size = 0x2000, scoped, tag = 'output window, operand 0, single buffered']
    #allocation3 [shape = 's32[1]{0}', space=sflag, size = 0x4, scoped, tag = 'scoped memory for tpu_custom_call.1']
    %7 = vsyncpa [#allocation3], 0
    // Predicated region
    $region2: #{tpu_custom_call.1} parent=1 // pred_check
      _
    $region3: #{tpu_custom_call.1} parent=1 // pred_check_branch
      %9 = sbr.rel (0) target = $region5
    $region4: #{tpu_custom_call.1} parent=1 // pred_region
      _
    $region5: #{tpu_custom_call.1} parent=1 // pred_fallthru
      _
    // Predicated region
    $region6: #{tpu_custom_call.1} parent=1 // pred_check
      _
    $region7: #{tpu_custom_call.1} parent=1 // pred_check_branch
      %11 = sbr.rel (0) target = $region9
    $region8: #{tpu_custom_call.1} parent=1 // pred_region
      _
    $region9: #{tpu_custom_call.1} parent=1 // pred_fallthru
      _
    %v12 = vld [vmem:[%s1] sm:$0xff]
    %v13 = vld [vmem:[%s1 + $0x8] sm:$0xff]
    %v14 = vld [vmem:[%s1 + $0x10] sm:$0xff]
    %v15 = vld [vmem:[%s1 + $0x18] sm:$0xff]
    %v16 = vld [vmem:[%s1 + $0x20] sm:$0xff]
    %v17 = vld [vmem:[%s1 + $0x28] sm:$0x1]
    %v18 = vld [vmem:[%s0] sm:$0xff]
    %v19 = vld [vmem:[%s0 + $0x8] sm:$0xff]
    %v20 = vld [vmem:[%s0 + $0x10] sm:$0xff]
    %v21 = vld [vmem:[%s0 + $0x18] sm:$0xff]
    %v22 = vld [vmem:[%s0 + $0x20] sm:$0xff]
    %v23 = vld [vmem:[%s0 + $0x28] sm:$0xff]
    %v24 = vld [vmem:[%s0 + $0x30] sm:$0xff]
    %v25 = vld [vmem:[%s0 + $0x38] sm:$0xff]
    %v26 = vld [vmem:[%s0 + $0x40] sm:$0xff]
    %v27 = vld [vmem:[%s0 + $0x48] sm:$0xff]
    %v28 = vld [vmem:[%s0 + $0x50] sm:$0xff]
    %v29 = vld [vmem:[%s0 + $0x58] sm:$0xff]
    %v30 = vld [vmem:[%s0 + $0x60] sm:$0xff]
    %v31 = vld [vmem:[%s0 + $0x68] sm:$0xff]
    %v32 = vld [vmem:[%s0 + $0x70] sm:$0xff]
    %v33 = vld [vmem:[%s0 + $0x78] sm:$0xff]
    %v34 = vlaneseq
    %v35 = vshrl.u32 %v34, 7
    %v36 = vsub.s32 0, %v35
    %v37 = vrot.slane %v17, %v36
    %vm38 = vcmask 64512
    %v40 = vsel %vm38, %v18, 0
    %v43 = vsel %vm38, %v19, 0
    %v46 = vsel %vm38, %v20, 0
    %v49 = vsel %vm38, %v21, 0
    %v52 = vsel %vm38, %v22, 0
    %v55 = vsel %vm38, %v23, 0
    %v58 = vsel %vm38, %v24, 0
    %v61 = vsel %vm38, %v25, 0
    %v64 = vsel %vm38, %v26, 0
    %v67 = vsel %vm38, %v27, 0
    %v70 = vsel %vm38, %v28, 0
    %v73 = vsel %vm38, %v29, 0
    %v76 = vsel %vm38, %v30, 0
    %v79 = vsel %vm38, %v31, 0
    %v82 = vsel %vm38, %v32, 0
    %v85 = vsel %vm38, %v33, 0
    %87 = vmatprep.subr.mxu0 0.0
    %88 = vmatpush1.msra.mxu0 0.0
    %89 = vmatprep.subr.mxu0 0.0
    %90 = vmatpush1.msra.mxu0 0.0
    %91 = vmatprep.subr.mxu0 0.0
    %92 = vmatpush1.msra.mxu0 0.0
    %93 = vmatprep.subr.mxu0 0.0
    %94 = vmatpush1.msra.mxu0 0.0
    %95 = vmatprep.subr.mxu0 0.0
    %96 = vmatpush1.msra.mxu0 0.0
    %97 = vmatprep.subr.mxu0 0.0
    %98 = vmatpush1.msra.mxu0 0.0
    %99 = vmatprep.subr.mxu0 0.0
    %100 = vmatpush1.msra.mxu0 0.0
    %101 = vmatprep.subr.mxu0 0.0
    %102 = vmatpush1.msra.mxu0 0.0
    %103 = vmatprep.subr.mxu0 0.0
    %104 = vmatpush1.msra.mxu0 0.0
    %105 = vmatprep.subr.mxu0 0.0
    %106 = vmatpush1.msra.mxu0 0.0
    %107 = vmatprep.subr.mxu0 0.0
    %108 = vmatpush1.msra.mxu0 0.0
    %109 = vmatprep.subr.mxu0 0.0
    %110 = vmatpush1.msra.mxu0 0.0
    %111 = vmatprep.subr.mxu0 0.0
    %112 = vmatpush1.msra.mxu0 0.0
    %113 = vmatprep.subr.mxu0 0.0
    %114 = vmatpush1.msra.mxu0 0.0
    %115 = vmatprep.subr.mxu0 0.0
    %116 = vmatpush1.msra.mxu0 0.0
    %117 = vmatprep.subr.mxu0 0.0
    %118 = vmatpush1.msra.mxu0 %v12
    %119 = vmatprep.subr.mxu0 0.0
    %120 = vmatpush2.msra.mxu0 0.0
    %121 = vmatprep.subr.mxu0 0.0
    %122 = vmatpush2.msra.mxu0 0.0
    %123 = vmatprep.subr.mxu0 0.0
    %124 = vmatpush2.msra.mxu0 0.0
    %125 = vmatprep.subr.mxu0 0.0
    %126 = vmatpush2.msra.mxu0 0.0
    %127 = vmatprep.subr.mxu0 0.0
    %128 = vmatpush2.msra.mxu0 0.0
    %129 = vmatprep.subr.mxu0 0.0
    %130 = vmatpush2.msra.mxu0 0.0
    %131 = vmatprep.subr.mxu0 0.0
    %132 = vmatpush2.msra.mxu0 0.0
    %133 = vmatprep.subr.mxu0 0.0
    %134 = vmatpush2.msra.mxu0 0.0
    %135 = vmatprep.subr.mxu0 0.0
    %136 = vmatpush2.msra.mxu0 0.0
    %137 = vmatprep.subr.mxu0 0.0
    %138 = vmatpush2.msra.mxu0 0.0
    %139 = vmatprep.subr.mxu0 0.0
    %140 = vmatpush2.msra.mxu0 0.0
    %141 = vmatprep.subr.mxu0 0.0
    %142 = vmatpush2.msra.mxu0 0.0
    %143 = vmatprep.subr.mxu0 0.0
    %144 = vmatpush2.msra.mxu0 0.0
    %145 = vmatprep.subr.mxu0 0.0
    %146 = vmatpush2.msra.mxu0 0.0
    %147 = vmatprep.subr.mxu0 0.0
    %148 = vmatpush2.msra.mxu0 0.0
    %149 = vmatprep.subr.mxu0 0.0
    %150 = vmatpush2.msra.mxu0 0.0
    %151 = vmatprep.mubr.f32.mxu0 0.0
    %152 = vmatmul.mubr.f32.gmra.mxu0 %v40
    %v153 = vpop.f32.mrf.mxu0
    %v154 = vadd.f32 %v37, %v153
    %v155 = vpop.f32.mrf.mxu0
    %156 = vmatprep.mubr.f32.mxu0 0.0
    %157 = vmatmul.mubr.f32.gmra.mxu0 %v43
    %v158 = vpop.f32.mrf.mxu0
    %v159 = vadd.f32 %v37, %v158
    %v160 = vpop.f32.mrf.mxu0
    %161 = vmatprep.mubr.f32.mxu0 0.0
    %162 = vmatmul.mubr.f32.gmra.mxu0 %v46
    %v163 = vpop.f32.mrf.mxu0
    %v164 = vadd.f32 %v37, %v163
    %v165 = vpop.f32.mrf.mxu0
    %166 = vmatprep.mubr.f32.mxu0 0.0
    %167 = vmatmul.mubr.f32.gmra.mxu0 %v49
    %v168 = vpop.f32.mrf.mxu0
    %v169 = vadd.f32 %v37, %v168
    %v170 = vpop.f32.mrf.mxu0
    %171 = vmatprep.mubr.f32.mxu0 0.0
    %172 = vmatmul.mubr.f32.gmra.mxu0 %v52
    %v173 = vpop.f32.mrf.mxu0
    %v174 = vadd.f32 %v37, %v173
    %v175 = vpop.f32.mrf.mxu0
    %176 = vmatprep.mubr.f32.mxu0 0.0
    %177 = vmatmul.mubr.f32.gmra.mxu0 %v55
    %v178 = vpop.f32.mrf.mxu0
    %v179 = vadd.f32 %v37, %v178
    %v180 = vpop.f32.mrf.mxu0
    %181 = vmatprep.mubr.f32.mxu0 0.0
    %182 = vmatmul.mubr.f32.gmra.mxu0 %v58
    %v183 = vpop.f32.mrf.mxu0
    %v184 = vadd.f32 %v37, %v183
    %v185 = vpop.f32.mrf.mxu0
    %186 = vmatprep.mubr.f32.mxu0 0.0
    %187 = vmatmul.mubr.f32.gmra.mxu0 %v61
    %v188 = vpop.f32.mrf.mxu0
    %v189 = vadd.f32 %v37, %v188
    %v190 = vpop.f32.mrf.mxu0
    %191 = vmatprep.mubr.f32.mxu0 0.0
    %192 = vmatmul.mubr.f32.gmra.mxu0 %v64
    %v193 = vpop.f32.mrf.mxu0
    %v194 = vadd.f32 %v37, %v193
    %v195 = vpop.f32.mrf.mxu0
    %196 = vmatprep.mubr.f32.mxu0 0.0
    %197 = vmatmul.mubr.f32.gmra.mxu0 %v67
    %v198 = vpop.f32.mrf.mxu0
    %v199 = vpop.f32.mrf.mxu0
    %200 = vmatprep.mubr.f32.mxu0 0.0
    %201 = vmatmul.mubr.f32.gmra.mxu0 %v70
    %v202 = vpop.f32.mrf.mxu0
    %v203 = vadd.f32 %v37, %v202
    %v204 = vpop.f32.mrf.mxu0
    %205 = vmatprep.mubr.f32.mxu0 0.0
    %206 = vmatmul.mubr.f32.gmra.mxu0 %v73
    %v207 = vpop.f32.mrf.mxu0
    %v208 = vpop.f32.mrf.mxu0
    %209 = vmatprep.mubr.f32.mxu0 0.0
    %210 = vmatmul.mubr.f32.gmra.mxu0 %v76
    %v211 = vpop.f32.mrf.mxu0
    %v212 = vadd.f32 %v37, %v211
    %v213 = vpop.f32.mrf.mxu0
    %214 = vmatprep.mubr.f32.mxu0 0.0
    %215 = vmatmul.mubr.f32.gmra.mxu0 %v79
    %v216 = vpop.f32.mrf.mxu0
    %v217 = vpop.f32.mrf.mxu0
    %218 = vmatprep.mubr.f32.mxu0 0.0
    %219 = vmatmul.mubr.f32.gmra.mxu0 %v82
    %v220 = vpop.f32.mrf.mxu0
    %v221 = vadd.f32 %v37, %v220
    %v222 = vpop.f32.mrf.mxu0
    %223 = vmatprep.mubr.f32.mxu0 0.0
    %224 = vmatmul.mubr.f32.gmra.mxu0 %v85
    %v225 = vpop.f32.mrf.mxu0
    %v226 = vadd.f32 %v37, %v225
    %v227 = vpop.f32.mrf.mxu0
    %228 = vdwg.mxu0
    %vm229 = vcmask 785408
    %v230 = vsel %vm229, %v154, -inf
    %231 = vmax.xlane.f32.xlu0 %v230
    %v232 = vpop.xlane.xlu0 %231
    %v233 = vsel %vm229, %v159, -inf
    %234 = vmax.xlane.f32.xlu0 %v233
    %v235 = vpop.xlane.xlu0 %234
    %v236 = vsub.f32 %v154, %v232
    %v237 = vsub.f32 %v159, %v235
    %v238 = vmul.f32 %v236, 1.442695
    %v239 = vpow.pop %v238
    %v240 = vmul.f32 %v237, 1.442695
    %v241 = vpow.pop %v240
    %244 = vrot.lane.b32.xlu0 %v239, 96
    %v245 = vpop.permute.xlu0 %244
    %246 = vrot.lane.b32.xlu0 %v241, 96
    %v247 = vpop.permute.xlu0 %246
    %vm250 = vcmask 261120
    %v251 = vsel %vm250, %v245, 0.0
    %252 = vadd.xlane.f32.xlu0 %v251
    %v253 = vpop.xlane.xlu0 %252
    %v254 = vsel %vm250, %v247, 0.0
    %255 = vadd.xlane.f32.xlu0 %v254
    %v256 = vpop.xlane.xlu0 %255
    %v257 = vrcp.pop %v253
    %v258 = vrcp.pop %v256
    %v259 = vmul.f32 %v239, %v257
    %v260 = vmul.f32 %v241, %v258
    %261 = vrot.lane.b32.xlu0 %v239, 64
    %v262 = vpop.permute.xlu0 %261
    %263 = vrot.lane.b32.xlu0 %v241, 64
    %v264 = vpop.permute.xlu0 %263
    %v267 = vsel %vm250, %v262, 0.0
    %268 = vadd.xlane.f32.xlu0 %v267
    %v269 = vpop.xlane.xlu0 %268
    %v270 = vsel %vm250, %v264, 0.0
    %271 = vadd.xlane.f32.xlu0 %v270
    %v272 = vpop.xlane.xlu0 %271
    %v273 = vrcp.pop %v269
    %v274 = vrcp.pop %v272
    %v275 = vmul.f32 %v239, %v273
    %v276 = vmul.f32 %v241, %v274
    %v277 = vtanh.pop %v154
    %v278 = vtanh.pop %v159
    %281 = vrot.lane.b32.xlu0 %v277, 64
    %v282 = vpop.permute.xlu0 %281
    %283 = vrot.lane.b32.xlu0 %v278, 64
    %v284 = vpop.permute.xlu0 %283
    %v287 = vmul.f32 %v259, %v282
    %v288 = vmul.f32 %v260, %v284
    %v289 = vtanh.pop %v287
    %v290 = vtanh.pop %v288
    %293 = vrot.lane.b32.xlu0 %v289, 32
    %v294 = vpop.permute.xlu0 %293
    %295 = vrot.lane.b32.xlu0 %v290, 32
    %v296 = vpop.permute.xlu0 %295
    %v299 = vmul.f32 %v275, %v294
    %v300 = vmul.f32 %v276, %v296
    %v301 = vsel %vm229, %v164, -inf
    %302 = vmax.xlane.f32.xlu0 %v301
    %v303 = vpop.xlane.xlu0 %302
    %v304 = vsel %vm229, %v169, -inf
    %305 = vmax.xlane.f32.xlu0 %v304
    %v306 = vpop.xlane.xlu0 %305
    %v307 = vsub.f32 %v164, %v303
    %v308 = vsub.f32 %v169, %v306
    %v309 = vmul.f32 %v307, 1.442695
    %v310 = vpow.pop %v309
    %v311 = vmul.f32 %v308, 1.442695
    %v312 = vpow.pop %v311
    %v313 = vsel %vm250, %v310, 0.0
    %314 = vadd.xlane.f32.xlu0 %v313
    %v315 = vpop.xlane.xlu0 %314
    %v316 = vsel %vm250, %v312, 0.0
    %317 = vadd.xlane.f32.xlu0 %v316
    %v318 = vpop.xlane.xlu0 %317
    %v319 = vrcp.pop %v315
    %v320 = vrcp.pop %v318
    %v321 = vmul.f32 %v310, %v319
    %v322 = vmul.f32 %v312, %v320
    %325 = vrot.lane.b32.xlu0 %v310, 96
    %v326 = vpop.permute.xlu0 %325
    %327 = vrot.lane.b32.xlu0 %v312, 96
    %v328 = vpop.permute.xlu0 %327
    %v331 = vsel %vm250, %v326, 0.0
    %332 = vadd.xlane.f32.xlu0 %v331
    %v333 = vpop.xlane.xlu0 %332
    %v334 = vsel %vm250, %v328, 0.0
    %335 = vadd.xlane.f32.xlu0 %v334
    %v336 = vpop.xlane.xlu0 %335
    %v337 = vrcp.pop %v333
    %v338 = vrcp.pop %v336
    %v339 = vmul.f32 %v310, %v337
    %v340 = vmul.f32 %v312, %v338
    %341 = vrot.lane.b32.xlu0 %v310, 64
    %v342 = vpop.permute.xlu0 %341
    %343 = vrot.lane.b32.xlu0 %v312, 64
    %v344 = vpop.permute.xlu0 %343
    %v347 = vsel %vm250, %v342, 0.0
    %348 = vadd.xlane.f32.xlu0 %v347
    %v349 = vpop.xlane.xlu0 %348
    %v350 = vsel %vm250, %v344, 0.0
    %351 = vadd.xlane.f32.xlu0 %v350
    %v352 = vpop.xlane.xlu0 %351
    %v353 = vrcp.pop %v349
    %v354 = vrcp.pop %v352
    %v355 = vmul.f32 %v310, %v353
    %v356 = vmul.f32 %v312, %v354
    %v357 = vtanh.pop %v164
    %v358 = vtanh.pop %v169
    %v359 = vlaneseq
    %v360 = vshrl.u32 %v359, 7
    %v361 = vsub.s32 1, %v360
    %v362 = vrot.slane %v289, %v361
    %364 = vrot.lane.b32.xlu0 %v362, 96
    %v365 = vpop.permute.xlu0 %364
    %v367 = vmul.f32 %v321, %v365
    %v368 = vmul.f32 %v322, %v365
    %371 = vrot.lane.b32.xlu0 %v357, 64
    %v372 = vpop.permute.xlu0 %371
    %373 = vrot.lane.b32.xlu0 %v358, 64
    %v374 = vpop.permute.xlu0 %373
    %v377 = vmul.f32 %v339, %v372
    %v378 = vmul.f32 %v340, %v374
    %381 = vrot.lane.b32.xlu0 %v377, 96
    %v382 = vpop.permute.xlu0 %381
    %383 = vrot.lane.b32.xlu0 %v378, 96
    %v384 = vpop.permute.xlu0 %383
    %v387 = vadd.f32 %v367, %v382
    %v388 = vadd.f32 %v368, %v384
    %v389 = vtanh.pop %v387
    %v390 = vtanh.pop %v388
    %393 = vrot.lane.b32.xlu0 %v389, 64
    %v394 = vpop.permute.xlu0 %393
    %395 = vrot.lane.b32.xlu0 %v390, 64
    %v396 = vpop.permute.xlu0 %395
    %v399 = vmul.f32 %v355, %v394
    %v400 = vmul.f32 %v356, %v396
    %v401 = vsel %vm229, %v174, -inf
    %402 = vmax.xlane.f32.xlu0 %v401
    %v403 = vpop.xlane.xlu0 %402
    %v404 = vsel %vm229, %v179, -inf
    %405 = vmax.xlane.f32.xlu0 %v404
    %v406 = vpop.xlane.xlu0 %405
    %v407 = vsub.f32 %v174, %v403
    %v408 = vsub.f32 %v179, %v406
    %v409 = vmul.f32 %v407, 1.442695
    %v410 = vpow.pop %v409
    %v411 = vmul.f32 %v408, 1.442695
    %v412 = vpow.pop %v411
    %v413 = vsel %vm250, %v410, 0.0
    %414 = vadd.xlane.f32.xlu0 %v413
    %v415 = vpop.xlane.xlu0 %414
    %v416 = vsel %vm250, %v412, 0.0
    %417 = vadd.xlane.f32.xlu0 %v416
    %v418 = vpop.xlane.xlu0 %417
    %v419 = vrcp.pop %v415
    %v420 = vrcp.pop %v418
    %v421 = vmul.f32 %v410, %v419
    %v422 = vmul.f32 %v412, %v420
    %425 = vrot.lane.b32.xlu0 %v410, 96
    %v426 = vpop.permute.xlu0 %425
    %427 = vrot.lane.b32.xlu0 %v412, 96
    %v428 = vpop.permute.xlu0 %427
    %v431 = vsel %vm250, %v426, 0.0
    %432 = vadd.xlane.f32.xlu0 %v431
    %v433 = vpop.xlane.xlu0 %432
    %v434 = vsel %vm250, %v428, 0.0
    %435 = vadd.xlane.f32.xlu0 %v434
    %v436 = vpop.xlane.xlu0 %435
    %v437 = vrcp.pop %v433
    %v438 = vrcp.pop %v436
    %v439 = vmul.f32 %v410, %v437
    %v440 = vmul.f32 %v412, %v438
    %441 = vrot.lane.b32.xlu0 %v410, 64
    %v442 = vpop.permute.xlu0 %441
    %443 = vrot.lane.b32.xlu0 %v412, 64
    %v444 = vpop.permute.xlu0 %443
    %v447 = vsel %vm250, %v442, 0.0
    %448 = vadd.xlane.f32.xlu0 %v447
    %v449 = vpop.xlane.xlu0 %448
    %v450 = vsel %vm250, %v444, 0.0
    %451 = vadd.xlane.f32.xlu0 %v450
    %v452 = vpop.xlane.xlu0 %451
    %v453 = vrcp.pop %v449
    %v454 = vrcp.pop %v452
    %v455 = vmul.f32 %v410, %v453
    %v456 = vmul.f32 %v412, %v454
    %v457 = vtanh.pop %v174
    %v458 = vtanh.pop %v179
    %v459 = vlaneseq
    %v460 = vshrl.u32 %v459, 7
    %v461 = vsub.s32 2, %v460
    %v462 = vrot.slane %v389, %v461
    %v463 = vmul.f32 %v421, %v462
    %v464 = vmul.f32 %v422, %v462
    %467 = vrot.lane.b32.xlu0 %v457, 64
    %v468 = vpop.permute.xlu0 %467
    %469 = vrot.lane.b32.xlu0 %v458, 64
    %v470 = vpop.permute.xlu0 %469
    %v473 = vmul.f32 %v439, %v468
    %v474 = vmul.f32 %v440, %v470
    %477 = vrot.lane.b32.xlu0 %v473, 96
    %v478 = vpop.permute.xlu0 %477
    %479 = vrot.lane.b32.xlu0 %v474, 96
    %v480 = vpop.permute.xlu0 %479
    %v483 = vadd.f32 %v463, %v478
    %v484 = vadd.f32 %v464, %v480
    %v485 = vtanh.pop %v483
    %v486 = vtanh.pop %v484
    %489 = vrot.lane.b32.xlu0 %v485, 64
    %v490 = vpop.permute.xlu0 %489
    %491 = vrot.lane.b32.xlu0 %v486, 64
    %v492 = vpop.permute.xlu0 %491
    %v495 = vmul.f32 %v455, %v490
    %v496 = vmul.f32 %v456, %v492
    %v497 = vsel %vm229, %v184, -inf
    %498 = vmax.xlane.f32.xlu0 %v497
    %v499 = vpop.xlane.xlu0 %498
    %v500 = vsel %vm229, %v189, -inf
    %501 = vmax.xlane.f32.xlu0 %v500
    %v502 = vpop.xlane.xlu0 %501
    %v503 = vsub.f32 %v184, %v499
    %v504 = vsub.f32 %v189, %v502
    %v505 = vmul.f32 %v503, 1.442695
    %v506 = vpow.pop %v505
    %v507 = vmul.f32 %v504, 1.442695
    %v508 = vpow.pop %v507
    %v509 = vsel %vm250, %v506, 0.0
    %510 = vadd.xlane.f32.xlu0 %v509
    %v511 = vpop.xlane.xlu0 %510
    %v512 = vsel %vm250, %v508, 0.0
    %513 = vadd.xlane.f32.xlu0 %v512
    %v514 = vpop.xlane.xlu0 %513
    %v515 = vrcp.pop %v511
    %v516 = vrcp.pop %v514
    %v517 = vmul.f32 %v506, %v515
    %v518 = vmul.f32 %v508, %v516
    %521 = vrot.lane.b32.xlu0 %v506, 96
    %v522 = vpop.permute.xlu0 %521
    %523 = vrot.lane.b32.xlu0 %v508, 96
    %v524 = vpop.permute.xlu0 %523
    %v527 = vsel %vm250, %v522, 0.0
    %528 = vadd.xlane.f32.xlu0 %v527
    %v529 = vpop.xlane.xlu0 %528
    %v530 = vsel %vm250, %v524, 0.0
    %531 = vadd.xlane.f32.xlu0 %v530
    %v532 = vpop.xlane.xlu0 %531
    %v533 = vrcp.pop %v529
    %v534 = vrcp.pop %v532
    %v535 = vmul.f32 %v506, %v533
    %v536 = vmul.f32 %v508, %v534
    %537 = vrot.lane.b32.xlu0 %v506, 64
    %v538 = vpop.permute.xlu0 %537
    %539 = vrot.lane.b32.xlu0 %v508, 64
    %v540 = vpop.permute.xlu0 %539
    %v543 = vsel %vm250, %v538, 0.0
    %544 = vadd.xlane.f32.xlu0 %v543
    %v545 = vpop.xlane.xlu0 %544
    %v546 = vsel %vm250, %v540, 0.0
    %547 = vadd.xlane.f32.xlu0 %v546
    %v548 = vpop.xlane.xlu0 %547
    %v549 = vrcp.pop %v545
    %v550 = vrcp.pop %v548
    %v551 = vmul.f32 %v506, %v549
    %v552 = vmul.f32 %v508, %v550
    %v553 = vtanh.pop %v184
    %v554 = vtanh.pop %v189
    %v555 = vlaneseq
    %v556 = vshrl.u32 %v555, 7
    %v557 = vsub.s32 3, %v556
    %v558 = vrot.slane %v485, %v557
    %v559 = vmul.f32 %v517, %v558
    %v560 = vmul.f32 %v518, %v558
    %563 = vrot.lane.b32.xlu0 %v553, 64
    %v564 = vpop.permute.xlu0 %563
    %565 = vrot.lane.b32.xlu0 %v554, 64
    %v566 = vpop.permute.xlu0 %565
    %v569 = vmul.f32 %v535, %v564
    %v570 = vmul.f32 %v536, %v566
    %573 = vrot.lane.b32.xlu0 %v569, 96
    %v574 = vpop.permute.xlu0 %573
    %575 = vrot.lane.b32.xlu0 %v570, 96
    %v576 = vpop.permute.xlu0 %575
    %v579 = vadd.f32 %v559, %v574
    %v580 = vadd.f32 %v560, %v576
    %v581 = vtanh.pop %v579
    %v582 = vtanh.pop %v580
    %585 = vrot.lane.b32.xlu0 %v581, 64
    %v586 = vpop.permute.xlu0 %585
    %587 = vrot.lane.b32.xlu0 %v582, 64
    %v588 = vpop.permute.xlu0 %587
    %v591 = vmul.f32 %v551, %v586
    %v592 = vmul.f32 %v552, %v588
    %601 = vrot.lane.b32.xlu0 %v299, 64
    %v602 = vpop.permute.xlu0 %601
    %603 = vrot.lane.b32.xlu0 %v300, 64
    %v604 = vpop.permute.xlu0 %603
    %605 = vrot.lane.b32.xlu0 %v399, 64
    %v606 = vpop.permute.xlu0 %605
    %607 = vrot.lane.b32.xlu0 %v400, 64
    %v608 = vpop.permute.xlu0 %607
    %609 = vrot.lane.b32.xlu0 %v495, 64
    %v610 = vpop.permute.xlu0 %609
    %611 = vrot.lane.b32.xlu0 %v496, 64
    %v612 = vpop.permute.xlu0 %611
    %613 = vrot.lane.b32.xlu0 %v591, 64
    %v614 = vpop.permute.xlu0 %613
    %615 = vrot.lane.b32.xlu0 %v592, 64
    %v616 = vpop.permute.xlu0 %615
    %v617 = vsel %vm250, %v602, 0
    %v619 = vsel %vm250, %v604, 0
    %v621 = vsel %vm250, %v606, 0
    %v623 = vsel %vm250, %v608, 0
    %v625 = vsel %vm250, %v610, 0
    %v627 = vsel %vm250, %v612, 0
    %v629 = vsel %vm250, %v614, 0
    %v631 = vsel %vm250, %v616, 0
    %633 = vmatprep.subr.mxu0 0.0
    %634 = vmatpush1.msra.mxu0 0.0
    %635 = vmatprep.subr.mxu0 0.0
    %636 = vmatpush1.msra.mxu0 0.0
    %637 = vmatprep.subr.mxu0 0.0
    %638 = vmatpush1.msra.mxu0 0.0
    %639 = vmatprep.subr.mxu0 0.0
    %640 = vmatpush1.msra.mxu0 0.0
    %641 = vmatprep.subr.mxu0 0.0
    %642 = vmatpush1.msra.mxu0 0.0
    %643 = vmatprep.subr.mxu0 0.0
    %644 = vmatpush1.msra.mxu0 0.0
    %645 = vmatprep.subr.mxu0 0.0
    %646 = vmatpush1.msra.mxu0 0.0
    %647 = vmatprep.subr.mxu0 0.0
    %648 = vmatpush1.msra.mxu0 0.0
    %649 = vmatprep.subr.mxu0 0.0
    %650 = vmatpush1.msra.mxu0 0.0
    %651 = vmatprep.subr.mxu0 0.0
    %652 = vmatpush1.msra.mxu0 0.0
    %653 = vmatprep.subr.mxu0 0.0
    %654 = vmatpush1.msra.mxu0 0.0
    %655 = vmatprep.subr.mxu0 0.0
    %656 = vmatpush1.msra.mxu0 0.0
    %657 = vmatprep.subr.mxu0 0.0
    %658 = vmatpush1.msra.mxu0 %v16
    %659 = vmatprep.subr.mxu0 0.0
    %660 = vmatpush1.msra.mxu0 %v15
    %661 = vmatprep.subr.mxu0 0.0
    %662 = vmatpush1.msra.mxu0 %v14
    %663 = vmatprep.subr.mxu0 0.0
    %664 = vmatpush1.msra.mxu0 %v13
    %665 = vmatprep.subr.mxu0 0.0
    %666 = vmatpush2.msra.mxu0 0.0
    %667 = vmatprep.subr.mxu0 0.0
    %668 = vmatpush2.msra.mxu0 0.0
    %669 = vmatprep.subr.mxu0 0.0
    %670 = vmatpush2.msra.mxu0 0.0
    %671 = vmatprep.subr.mxu0 0.0
    %672 = vmatpush2.msra.mxu0 0.0
    %673 = vmatprep.subr.mxu0 0.0
    %674 = vmatpush2.msra.mxu0 0.0
    %675 = vmatprep.subr.mxu0 0.0
    %676 = vmatpush2.msra.mxu0 0.0
    %677 = vmatprep.subr.mxu0 0.0
    %678 = vmatpush2.msra.mxu0 0.0
    %679 = vmatprep.subr.mxu0 0.0
    %680 = vmatpush2.msra.mxu0 0.0
    %681 = vmatprep.subr.mxu0 0.0
    %682 = vmatpush2.msra.mxu0 0.0
    %683 = vmatprep.subr.mxu0 0.0
    %684 = vmatpush2.msra.mxu0 0.0
    %685 = vmatprep.subr.mxu0 0.0
    %686 = vmatpush2.msra.mxu0 0.0
    %687 = vmatprep.subr.mxu0 0.0
    %688 = vmatpush2.msra.mxu0 0.0
    %689 = vmatprep.subr.mxu0 0.0
    %690 = vmatpush2.msra.mxu0 0.0
    %691 = vmatprep.subr.mxu0 0.0
    %692 = vmatpush2.msra.mxu0 0.0
    %693 = vmatprep.subr.mxu0 0.0
    %694 = vmatpush2.msra.mxu0 0.0
    %695 = vmatprep.subr.mxu0 0.0
    %696 = vmatpush2.msra.mxu0 0.0
    %697 = vmatprep.mubr.f32.mxu0 0.0
    %698 = vmatmul.mubr.f32.gmra.mxu0 %v617
    %v699 = vpop.f32.mrf.mxu0
    %v700 = vadd.f32 0.0, %v699
    %v701 = vpop.f32.mrf.mxu0
    %702 = vmatprep.mubr.f32.mxu0 0.0
    %703 = vmatmul.mubr.f32.gmra.mxu0 %v619
    %v704 = vpop.f32.mrf.mxu0
    %v705 = vpop.f32.mrf.mxu0
    %706 = vmatprep.mubr.f32.mxu0 0.0
    %707 = vmatmul.mubr.f32.gmra.mxu0 %v621
    %v708 = vpop.f32.mrf.mxu0
    %v709 = vadd.f32 0.0, %v708
    %v710 = vpop.f32.mrf.mxu0
    %711 = vmatprep.mubr.f32.mxu0 0.0
    %712 = vmatmul.mubr.f32.gmra.mxu0 %v623
    %v713 = vpop.f32.mrf.mxu0
    %v714 = vpop.f32.mrf.mxu0
    %715 = vmatprep.mubr.f32.mxu0 0.0
    %716 = vmatmul.mubr.f32.gmra.mxu0 %v625
    %v717 = vpop.f32.mrf.mxu0
    %v718 = vadd.f32 0.0, %v717
    %v719 = vpop.f32.mrf.mxu0
    %720 = vmatprep.mubr.f32.mxu0 0.0
    %721 = vmatmul.mubr.f32.gmra.mxu0 %v627
    %v722 = vpop.f32.mrf.mxu0
    %v723 = vpop.f32.mrf.mxu0
    %724 = vmatprep.mubr.f32.mxu0 0.0
    %725 = vmatmul.mubr.f32.gmra.mxu0 %v629
    %v726 = vpop.f32.mrf.mxu0
    %v727 = vadd.f32 0.0, %v726
    %v728 = vpop.f32.mrf.mxu0
    %729 = vmatprep.mubr.f32.mxu0 0.0
    %730 = vmatmul.mubr.f32.gmra.mxu0 %v631
    %v731 = vpop.f32.mrf.mxu0
    %v732 = vadd.f32 0.0, %v731
    %v733 = vpop.f32.mrf.mxu0
    %734 = vdwg.mxu0
    %v735 = vadd.f32 %v194, %v700
    %v736 = vsel %vm229, %v735, -inf
    %737 = vmax.xlane.f32.xlu0 %v736
    %v738 = vpop.xlane.xlu0 %737
    %v739 = vsub.f32 %v735, %v738
    %v740 = vmul.f32 %v739, 1.442695
    %v741 = vpow.pop %v740
    %v742 = vsel %vm250, %v741, 0.0
    %743 = vadd.xlane.f32.xlu0 %v742
    %v744 = vpop.xlane.xlu0 %743
    %v745 = vrcp.pop %v744
    %v746 = vmul.f32 %v741, %v745
    %748 = vrot.lane.b32.xlu0 %v741, 96
    %v749 = vpop.permute.xlu0 %748
    %v751 = vsel %vm250, %v749, 0.0
    %752 = vadd.xlane.f32.xlu0 %v751
    %v753 = vpop.xlane.xlu0 %752
    %v754 = vrcp.pop %v753
    %v755 = vmul.f32 %v741, %v754
    %v756 = vtanh.pop %v735
    %v757 = vlaneseq
    %v758 = vshrl.u32 %v757, 7
    %v759 = vsub.s32 0, %v758
    %v760 = vrot.slane %v581, %v759
    %v761 = vmul.f32 %v746, %v760
    %763 = vrot.lane.b32.xlu0 %v756, 64
    %v764 = vpop.permute.xlu0 %763
    %v766 = vmul.f32 %v755, %v764
    %768 = vrot.lane.b32.xlu0 %v766, 96
    %v769 = vpop.permute.xlu0 %768
    %v771 = vadd.f32 %v761, %v769
    %v772 = vtanh.pop %v771
    %v773 = vadd.f32 %v203, %v709
    %v774 = vsel %vm229, %v773, -inf
    %775 = vmax.xlane.f32.xlu0 %v774
    %v776 = vpop.xlane.xlu0 %775
    %v777 = vsub.f32 %v773, %v776
    %v778 = vmul.f32 %v777, 1.442695
    %v779 = vpow.pop %v778
    %v780 = vsel %vm250, %v779, 0.0
    %781 = vadd.xlane.f32.xlu0 %v780
    %v782 = vpop.xlane.xlu0 %781
    %v783 = vrcp.pop %v782
    %v784 = vmul.f32 %v779, %v783
    %786 = vrot.lane.b32.xlu0 %v779, 96
    %v787 = vpop.permute.xlu0 %786
    %v789 = vsel %vm250, %v787, 0.0
    %790 = vadd.xlane.f32.xlu0 %v789
    %v791 = vpop.xlane.xlu0 %790
    %v792 = vrcp.pop %v791
    %v793 = vmul.f32 %v779, %v792
    %v794 = vtanh.pop %v773
    %v795 = vlaneseq
    %v796 = vshrl.u32 %v795, 7
    %v797 = vsub.s32 1, %v796
    %v798 = vrot.slane %v772, %v797
    %v799 = vmul.f32 %v784, %v798
    %801 = vrot.lane.b32.xlu0 %v794, 64
    %v802 = vpop.permute.xlu0 %801
    %v804 = vmul.f32 %v793, %v802
    %806 = vrot.lane.b32.xlu0 %v804, 96
    %v807 = vpop.permute.xlu0 %806
    %v809 = vadd.f32 %v799, %v807
    %v810 = vtanh.pop %v809
    %v811 = vadd.f32 %v212, %v718
    %v812 = vsel %vm229, %v811, -inf
    %813 = vmax.xlane.f32.xlu0 %v812
    %v814 = vpop.xlane.xlu0 %813
    %v815 = vsub.f32 %v811, %v814
    %v816 = vmul.f32 %v815, 1.442695
    %v817 = vpow.pop %v816
    %v818 = vsel %vm250, %v817, 0.0
    %819 = vadd.xlane.f32.xlu0 %v818
    %v820 = vpop.xlane.xlu0 %819
    %v821 = vrcp.pop %v820
    %v822 = vmul.f32 %v817, %v821
    %824 = vrot.lane.b32.xlu0 %v817, 96
    %v825 = vpop.permute.xlu0 %824
    %v827 = vsel %vm250, %v825, 0.0
    %828 = vadd.xlane.f32.xlu0 %v827
    %v829 = vpop.xlane.xlu0 %828
    %v830 = vrcp.pop %v829
    %v831 = vmul.f32 %v817, %v830
    %v832 = vtanh.pop %v811
    %v833 = vlaneseq
    %v834 = vshrl.u32 %v833, 7
    %v835 = vsub.s32 2, %v834
    %v836 = vrot.slane %v810, %v835
    %v837 = vmul.f32 %v822, %v836
    %839 = vrot.lane.b32.xlu0 %v832, 64
    %v840 = vpop.permute.xlu0 %839
    %v842 = vmul.f32 %v831, %v840
    %844 = vrot.lane.b32.xlu0 %v842, 96
    %v845 = vpop.permute.xlu0 %844
    %v847 = vadd.f32 %v837, %v845
    %v848 = vtanh.pop %v847
    %v849 = vadd.f32 %v221, %v727
    %v850 = vadd.f32 %v226, %v732
    %v851 = vsel %vm229, %v849, -inf
    %852 = vmax.xlane.f32.xlu0 %v851
    %v853 = vpop.xlane.xlu0 %852
    %v854 = vsel %vm229, %v850, -inf
    %855 = vmax.xlane.f32.xlu0 %v854
    %v856 = vpop.xlane.xlu0 %855
    %v857 = vsub.f32 %v849, %v853
    %v858 = vsub.f32 %v850, %v856
    %v859 = vmul.f32 %v857, 1.442695
    %v860 = vpow.pop %v859
    %v861 = vmul.f32 %v858, 1.442695
    %v862 = vpow.pop %v861
    %v863 = vsel %vm250, %v860, 0.0
    %864 = vadd.xlane.f32.xlu0 %v863
    %v865 = vpop.xlane.xlu0 %864
    %v866 = vsel %vm250, %v862, 0.0
    %867 = vadd.xlane.f32.xlu0 %v866
    %v868 = vpop.xlane.xlu0 %867
    %v869 = vrcp.pop %v865
    %v870 = vrcp.pop %v868
    %v871 = vmul.f32 %v860, %v869
    %v872 = vmul.f32 %v862, %v870
    %875 = vrot.lane.b32.xlu0 %v860, 96
    %v876 = vpop.permute.xlu0 %875
    %877 = vrot.lane.b32.xlu0 %v862, 96
    %v878 = vpop.permute.xlu0 %877
    %v881 = vsel %vm250, %v876, 0.0
    %882 = vadd.xlane.f32.xlu0 %v881
    %v883 = vpop.xlane.xlu0 %882
    %v884 = vsel %vm250, %v878, 0.0
    %885 = vadd.xlane.f32.xlu0 %v884
    %v886 = vpop.xlane.xlu0 %885
    %v887 = vrcp.pop %v883
    %v888 = vrcp.pop %v886
    %v889 = vmul.f32 %v860, %v887
    %v890 = vmul.f32 %v862, %v888
    %891 = vrot.lane.b32.xlu0 %v860, 64
    %v892 = vpop.permute.xlu0 %891
    %893 = vrot.lane.b32.xlu0 %v862, 64
    %v894 = vpop.permute.xlu0 %893
    %v897 = vsel %vm250, %v892, 0.0
    %898 = vadd.xlane.f32.xlu0 %v897
    %v899 = vpop.xlane.xlu0 %898
    %v900 = vsel %vm250, %v894, 0.0
    %901 = vadd.xlane.f32.xlu0 %v900
    %v902 = vpop.xlane.xlu0 %901
    %v903 = vrcp.pop %v899
    %v904 = vrcp.pop %v902
    %v905 = vmul.f32 %v860, %v903
    %v906 = vmul.f32 %v862, %v904
    %v907 = vtanh.pop %v849
    %v908 = vtanh.pop %v850
    %v909 = vlaneseq
    %v910 = vshrl.u32 %v909, 7
    %v911 = vsub.s32 3, %v910
    %v912 = vrot.slane %v848, %v911
    %v913 = vmul.f32 %v871, %v912
    %v914 = vmul.f32 %v872, %v912
    %917 = vrot.lane.b32.xlu0 %v907, 64
    %v918 = vpop.permute.xlu0 %917
    %919 = vrot.lane.b32.xlu0 %v908, 64
    %v920 = vpop.permute.xlu0 %919
    %v923 = vmul.f32 %v889, %v918
    %v924 = vmul.f32 %v890, %v920
    %927 = vrot.lane.b32.xlu0 %v923, 96
    %v928 = vpop.permute.xlu0 %927
    %929 = vrot.lane.b32.xlu0 %v924, 96
    %v930 = vpop.permute.xlu0 %929
    %v933 = vadd.f32 %v913, %v928
    %v934 = vadd.f32 %v914, %v930
    %v935 = vtanh.pop %v933
    %v936 = vtanh.pop %v934
    %939 = vrot.lane.b32.xlu0 %v935, 64
    %v940 = vpop.permute.xlu0 %939
    %941 = vrot.lane.b32.xlu0 %v936, 64
    %v942 = vpop.permute.xlu0 %941
    %v945 = vmul.f32 %v905, %v940
    %v946 = vmul.f32 %v906, %v942
    %949 = vrot.lane.b32.xlu0 %v945, 64
    %v950 = vpop.permute.xlu0 %949
    %951 = vrot.lane.b32.xlu0 %v946, 64
    %v952 = vpop.permute.xlu0 %951
    %955 = vst.msk [vmem:[#allocation2] sm:$0xff] %vm250, %v950
    %956 = vst.msk [vmem:[#allocation2 + $0x8] sm:$0xff] %vm250, %v952
    // Predicated region
    $region10: #{tpu_custom_call.1} parent=1 // pred_check
      _
    $region11: #{tpu_custom_call.1} parent=1 // pred_check_branch
      %958 = sbr.rel (0) target = $region13
    $region12: #{tpu_custom_call.1} parent=1 // pred_region
      %s960 = ssub.s32 256, 256
      %961 = vsyncadd [#allocation3], %s960
      %s962 = sshll.u32 [#allocation2], 4
      %s963 = int_to_ptr.vmem [resolvable:$true] %s962
      %968 = dma.vmem_to_hbm [thread:$0]  %s963, 256, %s2, [#allocation3], 128, 128, 8
    $region13: #{tpu_custom_call.1} parent=1 // pred_fallthru
      _
    // Predicated region
    $region14: #{tpu_custom_call.1} parent=1 // pred_check
      _
    $region15: #{tpu_custom_call.1} parent=1 // pred_check_branch
      %970 = sbr.rel (0) target = $region17
    $region16: #{tpu_custom_call.1} parent=1 // pred_region
      %971 = dma.done [#allocation3], 256
    $region17: #{tpu_custom_call.1} parent=1 // pred_fallthru
      _
    %972 = vsyncpa [#allocation3], 1

</llo_original>
